<compile_context>
chip_gen: v6e
topology: v6e:2x2x1
jax: 0.10.0
libtpu: 0.0.40
codegen_flags: <defaults>
</compile_context>

<pallas_src>
import jax
import jax.numpy as jnp
import numpy as np
from jax import lax
from jax.experimental import pallas as pl
from jax.experimental.pallas import tpu as pltpu


def _make_upsample_kernel(img_w):
    """Builds the fused kernel; `img_w` (image width) is a static Python int."""

    def kernel(x_ref, m9_ref, w1_ref, b1_ref, w2_ref, b2_ref, wu_ref, bu_ref, o_ref):
        # x_ref : (1, 2C, L)   channel-major input, L = B*H*W  (lane-dense)
        # m9_ref: (9, L)       {0,1} tap-validity masks, row t = dy*3+dx
        # w1_ref: (C, 9*2C)  b1_ref: (C, 1)
        # w2_ref: (C, 9*C)   b2_ref: (C, 1)
        # wu_ref: (4*C2, 4*C) combined 4-phase ConvTranspose weight, bu_ref: (4*C2, 1)
        # o_ref : (1, 4*C2, L) phase-packed output (lane-dense)
        L = x_ref.shape[-1]
        x = x_ref[0]                      # (2C, L)
        m9 = m9_ref[...]                  # (9, L)

        def shift(v, off):
            # out[:, p] = v[:, (p + off) % L]; wrapped / out-of-bounds positions are
            # killed by the boundary mask, so the wrap values are harmless.
            if off == 0:
                return v
            k = off % L
            return jnp.concatenate([v[:, k:], v[:, :k]], axis=1)

        def conv3x3_relu(h, w_ref, b_ref):
            # Channel-major im2col: 9 lane-shifted, boundary-masked copies stacked on
            # the sublane axis -> one MXU matmul with K = 9*Cin.
            pieces = []
            for t in range(9):
                dy, dx = divmod(t, 3)
                v = shift(h, (dy - 1) * img_w + (dx - 1))
                if t != 4:                # center tap is always in-bounds
                    v = v * m9[t:t + 1, :]
                pieces.append(v)
            a = jnp.concatenate(pieces, axis=0)          # (9*Cin, L)
            y = jnp.dot(w_ref[...], a, preferred_element_type=jnp.float32)
            return jnp.maximum(y + b_ref[...], 0.0)      # (Cout, L), f32

        h = conv3x3_relu(x, w1_ref, b1_ref)              # conv1 + ReLU  (2C -> C)
        h = conv3x3_relu(h, w2_ref, b2_ref)              # conv2 + ReLU  (C  -> C)

        # ConvTranspose2d(k=3, s=2, p=1, output_padding=1) + ReLU, 4-phase sub-pixel:
        #   out[2m+py, 2n+px] depends only on h[m..m+1, n..n+1] (missing taps = 0).
        t00 = h                                           # h[m,   n  ]
        t01 = shift(h, 1) * m9[5:6, :]                    # h[m,   n+1]
        t10 = shift(h, img_w) * m9[7:8, :]                # h[m+1, n  ]
        t11 = shift(h, img_w + 1) * m9[8:9, :]            # h[m+1, n+1]
        a = jnp.concatenate([t00, t01, t10, t11], axis=0)          # (4C, L)
        y = jnp.dot(wu_ref[...], a, preferred_element_type=jnp.float32) + bu_ref[...]
        o_ref[0] = jnp.maximum(y, 0.0).astype(o_ref.dtype)         # (4*C2, L)

    return kernel


def _build_tap_masks(H, W, B, dtype):
    """(9, B*H*W) {0,1} masks: mask[t, p]=1 iff tap (dy,dx)=divmod(t,3) is in-bounds."""
    yy = jnp.arange(H)[:, None]
    xx = jnp.arange(W)[None, :]
    rows = []
    for t in range(9):
        dy, dx = divmod(t, 3)
        ok = ((yy + dy - 1 >= 0) & (yy + dy - 1 < H) &
              (xx + dx - 1 >= 0) & (xx + dx - 1 < W))
        rows.append(ok.reshape(-1))
    m = jnp.stack(rows, axis=0).astype(dtype)             # (9, H*W)
    return jnp.tile(m, (1, B))                            # (9, B*H*W)


def _pick_batch_split(N):
    """(grid_steps, images_per_step): >=2 steps when possible (both v7x TCs busy),
    remaining batch folded into each step (amortizes per-step overhead on v5e/v6e)."""
    if N % 2 == 0 and N >= 2:
        return 2, N // 2
    return N, 1


def prepare_params(params):
    """One-time re-layout of the module weights into channel-major matmul matrices."""
    w1, b1, w2, b2, wt, bt = params
    cin1 = w1.shape[2]
    C = w1.shape[3]
    C2 = wt.shape[1]
    # (Cout, 9*Cin): column index = (ky*3+kx)*Cin + ci  (matches kernel tap order).
    w1_cm = w1.reshape(9 * cin1, C).T                     # (C, 9*2C)
    w2_cm = w2.reshape(9 * C, C).T                        # (C, 9*C)
    # Combined 4-phase ConvTranspose weight: rows = phases [ee,eo,oe,oo] x C2,
    # cols = taps [h(m,n), h(m,n+1), h(m+1,n), h(m+1,n+1)] x C.
    z = jnp.zeros((C, C2), wt.dtype)
    s = lambda ky, kx: wt[:, :, ky, kx]                   # wt: (Cin, Cout, kh, kw)
    wu = jnp.concatenate([
        jnp.concatenate([s(1, 1), s(1, 2), s(2, 1), s(2, 2)], axis=1),
        jnp.concatenate([z,       s(1, 0), z,       s(2, 0)], axis=1),
        jnp.concatenate([z,       z,       s(0, 1), s(0, 2)], axis=1),
        jnp.concatenate([z,       z,       z,       s(0, 0)], axis=1),
    ], axis=0)                                            # (4C, 4*C2)
    wu_cm = wu.T                                          # (4*C2, 4C)
    bu = jnp.tile(bt, 4).reshape(4 * C2, 1)
    return (w1_cm, b1.reshape(C, 1), w2_cm, b2.reshape(C, 1), wu_cm, bu)


def upsample_forward(x, prep):
    """x: (N, 2C, H, W) NCHW (PyTorch layout). Returns (N, C//2, 2H, 2W) NCHW."""
    w1m, b1, w2m, b2, wum, bum = prep
    N, Cin, H, W = x.shape
    C2 = wum.shape[0] // 4

    steps, B = _pick_batch_split(N)
    HW = H * W
    L = B * HW

    # Channel-major, lane-dense relayout (tiny wrapper-side XLA transpose):
    #   xk[s, ci, b*H*W + y*W + x] = x[s*B + b, ci, y, x]
    xk = x.reshape(steps, B, Cin, HW).transpose(0, 2, 1, 3).reshape(steps, Cin, L)
    m9 = _build_tap_masks(H, W, B, x.dtype)

    kernel = _make_upsample_kernel(W)
    out_packed = pl.pallas_call(
        kernel,
        out_shape=jax.ShapeDtypeStruct((steps, 4 * C2, L), x.dtype),
        grid_spec=pltpu.PrefetchScalarGridSpec(
            num_scalar_prefetch=0,
            grid=(steps,),
            in_specs=[
                pl.BlockSpec((1, Cin, L), lambda s: (s, 0, 0)),
                pl.BlockSpec(m9.shape, lambda s: (0, 0)),
                pl.BlockSpec(w1m.shape, lambda s: (0, 0)),
                pl.BlockSpec(b1.shape, lambda s: (0, 0)),
                pl.BlockSpec(w2m.shape, lambda s: (0, 0)),
                pl.BlockSpec(b2.shape, lambda s: (0, 0)),
                pl.BlockSpec(wum.shape, lambda s: (0, 0)),
                pl.BlockSpec(bum.shape, lambda s: (0, 0)),
            ],
            out_specs=pl.BlockSpec((1, 4 * C2, L), lambda s: (s, 0, 0)),
        ),
        compiler_params=pltpu.CompilerParams(
            dimension_semantics=("parallel",)),
    )(xk, m9, w1m, b1, w2m, b2, wum, bum)

    # Interleave the packed phases (py, px) into (2H, 2W) and un-fold the batch
    # (tiny wrapper-side XLA op on ~N*4*C2*H*W elements).
    o = out_packed.reshape(steps, 2, 2, C2, B, H, W)      # (s, py, px, co, b, y, x)
    o = o.transpose(0, 4, 3, 5, 1, 6, 2)                  # (s, b, co, y, py, x, px)
    return o.reshape(N, C2, 2 * H, 2 * W)


def ref_forward(x_nhwc, params):
    """Pure-JAX NHWC reference (lax convs) for correctness checking."""
    w1, b1, w2, b2, wt, bt = params
    dn = ('NHWC', 'HWIO', 'NHWC')
    h = lax.conv_general_dilated(x_nhwc, w1, (1, 1), 'SAME', dimension_numbers=dn) + b1
    h = jnp.maximum(h, 0.0)
    h = lax.conv_general_dilated(h, w2, (1, 1), 'SAME', dimension_numbers=dn) + b2
    h = jnp.maximum(h, 0.0)
    w_conv = jnp.transpose(wt[:, :, ::-1, ::-1], (2, 3, 0, 1))
    h = lax.conv_general_dilated(h, w_conv, (1, 1), [(1, 2), (1, 2)],
                                 lhs_dilation=(2, 2), dimension_numbers=dn) + bt
    return jnp.maximum(h, 0.0)


def init_params(key, channels):
    C = channels
    k1, k2, k3, k4, k5, k6 = jax.random.split(key, 6)
    # Conv2d(2C -> C, 3x3): HWIO
    w1 = jax.random.normal(k1, (3, 3, 2 * C, C), jnp.float32) * 0.05
    b1 = jax.random.normal(k2, (C,), jnp.float32) * 0.01
    # Conv2d(C -> C, 3x3): HWIO
    w2 = jax.random.normal(k3, (3, 3, C, C), jnp.float32) * 0.05
    b2 = jax.random.normal(k4, (C,), jnp.float32) * 0.01
    # ConvTranspose2d(C -> C//2, 3x3): PyTorch layout (Cin, Cout, kh, kw)
    wt = jax.random.normal(k5, (C, C // 2, 3, 3), jnp.float32) * 0.05
    bt = jax.random.normal(k6, (C // 2,), jnp.float32) * 0.01
    return (w1, b1, w2, b2, wt, bt)


if __name__ == "__main__":
    key = jax.random.PRNGKey(0)
    channels = 8
    N, H, W = 2, 16, 16

    kx, kp = jax.random.split(key)
    # PyTorch-style NCHW input with 2*channels input channels: (2, 16, 16, 16).
    x = jax.random.normal(kx, (N, 2 * channels, H, W), jnp.float32)
    params = init_params(kp, channels)
    prep = prepare_params(params)          # one-time weight re-layout (hoisted)

    fwd = jax.jit(upsample_forward)
    out = jax.block_until_ready(fwd(x, prep))
    assert out.shape == (N, channels // 2, 2 * H, 2 * W), out.shape

    ref_nhwc = ref_forward(jnp.transpose(x, (0, 2, 3, 1)), params)
    ref = jax.block_until_ready(jnp.transpose(ref_nhwc, (0, 3, 1, 2)))
    np.testing.assert_allclose(np.asarray(out), np.asarray(ref),
                               rtol=1e-4, atol=1e-4)

    print("KERNEL_OK")
</pallas_src>

<mosaic_0001>
module attributes {stable_mosaic.version = 11 : i64} {
  func.func @kernel(%arg0: i32, %arg1: memref<1x16x256xf32, #tpu.memory_space<vmem>>, %arg2: memref<9x256xf32, #tpu.memory_space<vmem>>, %arg3: memref<8x144xf32, #tpu.memory_space<vmem>>, %arg4: memref<8x1xf32, #tpu.memory_space<vmem>>, %arg5: memref<8x72xf32, #tpu.memory_space<vmem>>, %arg6: memref<8x1xf32, #tpu.memory_space<vmem>>, %arg7: memref<16x32xf32, #tpu.memory_space<vmem>>, %arg8: memref<16x1xf32, #tpu.memory_space<vmem>>, %arg9: memref<1x16x256xf32, #tpu.memory_space<vmem>>) attributes {dimension_semantics = [#tpu.dimension_semantics<parallel>], iteration_bounds = array<i64: 2>, scalar_prefetch = 0 : i64, scratch_operands = 0 : i64, tpu.core_type = #tpu.core_type<tc>, window_params = [{transform_indices = @transform_0, window_bounds = array<i64: 1, 16, 256>}, {pipeline_mode = #tpu.pipeline_mode<synchronous>, transform_indices = @transform_1, window_bounds = array<i64: 9, 256>}, {pipeline_mode = #tpu.pipeline_mode<synchronous>, transform_indices = @transform_2, window_bounds = array<i64: 8, 144>}, {pipeline_mode = #tpu.pipeline_mode<synchronous>, transform_indices = @transform_3, window_bounds = array<i64: 8, 1>}, {pipeline_mode = #tpu.pipeline_mode<synchronous>, transform_indices = @transform_4, window_bounds = array<i64: 8, 72>}, {pipeline_mode = #tpu.pipeline_mode<synchronous>, transform_indices = @transform_5, window_bounds = array<i64: 8, 1>}, {pipeline_mode = #tpu.pipeline_mode<synchronous>, transform_indices = @transform_6, window_bounds = array<i64: 16, 32>}, {pipeline_mode = #tpu.pipeline_mode<synchronous>, transform_indices = @transform_7, window_bounds = array<i64: 16, 1>}, {transform_indices = @transform_8, window_bounds = array<i64: 1, 16, 256>}]} {
    %c0 = arith.constant 0 : index
    %c0_0 = arith.constant 0 : index
    %c0_1 = arith.constant 0 : index
    %0 = vector.load %arg1[%c0, %c0_0, %c0_1] : memref<1x16x256xf32, #tpu.memory_space<vmem>>, vector<1x16x256xf32>
    %1 = vector.shape_cast %0 : vector<1x16x256xf32> to vector<16x256xf32>
    %c0_2 = arith.constant 0 : index
    %c0_3 = arith.constant 0 : index
    %2 = vector.load %arg2[%c0_2, %c0_3] : memref<9x256xf32, #tpu.memory_space<vmem>>, vector<9x256xf32>
    %3 = vector.extract_strided_slice %1 {offsets = [0, 239], sizes = [16, 17], strides = [1, 1]} : vector<16x256xf32> to vector<16x17xf32>
    %4 = vector.extract_strided_slice %1 {offsets = [0, 0], sizes = [16, 239], strides = [1, 1]} : vector<16x256xf32> to vector<16x239xf32>
    %5 = tpu.concatenate %3, %4 in 1 : vector<16x17xf32>, vector<16x239xf32> -> vector<16x256xf32>
    %6 = vector.extract_strided_slice %2 {offsets = [0, 0], sizes = [1, 256], strides = [1, 1]} : vector<9x256xf32> to vector<1x256xf32>
    %7 = vector.broadcast %6 : vector<1x256xf32> to vector<16x256xf32>
    %8 = arith.mulf %5, %7 : vector<16x256xf32>
    %9 = vector.extract_strided_slice %1 {offsets = [0, 240], sizes = [16, 16], strides = [1, 1]} : vector<16x256xf32> to vector<16x16xf32>
    %10 = vector.extract_strided_slice %1 {offsets = [0, 0], sizes = [16, 240], strides = [1, 1]} : vector<16x256xf32> to vector<16x240xf32>
    %11 = tpu.concatenate %9, %10 in 1 : vector<16x16xf32>, vector<16x240xf32> -> vector<16x256xf32>
    %12 = vector.extract_strided_slice %2 {offsets = [1, 0], sizes = [1, 256], strides = [1, 1]} : vector<9x256xf32> to vector<1x256xf32>
    %13 = vector.broadcast %12 : vector<1x256xf32> to vector<16x256xf32>
    %14 = arith.mulf %11, %13 : vector<16x256xf32>
    %15 = vector.extract_strided_slice %1 {offsets = [0, 241], sizes = [16, 15], strides = [1, 1]} : vector<16x256xf32> to vector<16x15xf32>
    %16 = vector.extract_strided_slice %1 {offsets = [0, 0], sizes = [16, 241], strides = [1, 1]} : vector<16x256xf32> to vector<16x241xf32>
    %17 = tpu.concatenate %15, %16 in 1 : vector<16x15xf32>, vector<16x241xf32> -> vector<16x256xf32>
    %18 = vector.extract_strided_slice %2 {offsets = [2, 0], sizes = [1, 256], strides = [1, 1]} : vector<9x256xf32> to vector<1x256xf32>
    %19 = vector.broadcast %18 : vector<1x256xf32> to vector<16x256xf32>
    %20 = arith.mulf %17, %19 : vector<16x256xf32>
    %21 = vector.extract_strided_slice %1 {offsets = [0, 255], sizes = [16, 1], strides = [1, 1]} : vector<16x256xf32> to vector<16x1xf32>
    %22 = vector.extract_strided_slice %1 {offsets = [0, 0], sizes = [16, 255], strides = [1, 1]} : vector<16x256xf32> to vector<16x255xf32>
    %23 = tpu.concatenate %21, %22 in 1 : vector<16x1xf32>, vector<16x255xf32> -> vector<16x256xf32>
    %24 = vector.extract_strided_slice %2 {offsets = [3, 0], sizes = [1, 256], strides = [1, 1]} : vector<9x256xf32> to vector<1x256xf32>
    %25 = vector.broadcast %24 : vector<1x256xf32> to vector<16x256xf32>
    %26 = arith.mulf %23, %25 : vector<16x256xf32>
    %27 = vector.extract_strided_slice %1 {offsets = [0, 1], sizes = [16, 255], strides = [1, 1]} : vector<16x256xf32> to vector<16x255xf32>
    %28 = vector.extract_strided_slice %1 {offsets = [0, 0], sizes = [16, 1], strides = [1, 1]} : vector<16x256xf32> to vector<16x1xf32>
    %29 = tpu.concatenate %27, %28 in 1 : vector<16x255xf32>, vector<16x1xf32> -> vector<16x256xf32>
    %30 = vector.extract_strided_slice %2 {offsets = [5, 0], sizes = [1, 256], strides = [1, 1]} : vector<9x256xf32> to vector<1x256xf32>
    %31 = vector.broadcast %30 : vector<1x256xf32> to vector<16x256xf32>
    %32 = arith.mulf %29, %31 : vector<16x256xf32>
    %33 = vector.extract_strided_slice %1 {offsets = [0, 15], sizes = [16, 241], strides = [1, 1]} : vector<16x256xf32> to vector<16x241xf32>
    %34 = vector.extract_strided_slice %1 {offsets = [0, 0], sizes = [16, 15], strides = [1, 1]} : vector<16x256xf32> to vector<16x15xf32>
    %35 = tpu.concatenate %33, %34 in 1 : vector<16x241xf32>, vector<16x15xf32> -> vector<16x256xf32>
    %36 = vector.extract_strided_slice %2 {offsets = [6, 0], sizes = [1, 256], strides = [1, 1]} : vector<9x256xf32> to vector<1x256xf32>
    %37 = vector.broadcast %36 : vector<1x256xf32> to vector<16x256xf32>
    %38 = arith.mulf %35, %37 : vector<16x256xf32>
    %39 = vector.extract_strided_slice %1 {offsets = [0, 16], sizes = [16, 240], strides = [1, 1]} : vector<16x256xf32> to vector<16x240xf32>
    %40 = vector.extract_strided_slice %1 {offsets = [0, 0], sizes = [16, 16], strides = [1, 1]} : vector<16x256xf32> to vector<16x16xf32>
    %41 = tpu.concatenate %39, %40 in 1 : vector<16x240xf32>, vector<16x16xf32> -> vector<16x256xf32>
    %42 = vector.extract_strided_slice %2 {offsets = [7, 0], sizes = [1, 256], strides = [1, 1]} : vector<9x256xf32> to vector<1x256xf32>
    %43 = vector.broadcast %42 : vector<1x256xf32> to vector<16x256xf32>
    %44 = arith.mulf %41, %43 : vector<16x256xf32>
    %45 = vector.extract_strided_slice %1 {offsets = [0, 17], sizes = [16, 239], strides = [1, 1]} : vector<16x256xf32> to vector<16x239xf32>
    %46 = vector.extract_strided_slice %1 {offsets = [0, 0], sizes = [16, 17], strides = [1, 1]} : vector<16x256xf32> to vector<16x17xf32>
    %47 = tpu.concatenate %45, %46 in 1 : vector<16x239xf32>, vector<16x17xf32> -> vector<16x256xf32>
    %48 = vector.extract_strided_slice %2 {offsets = [8, 0], sizes = [1, 256], strides = [1, 1]} : vector<9x256xf32> to vector<1x256xf32>
    %49 = vector.broadcast %48 : vector<1x256xf32> to vector<16x256xf32>
    %50 = arith.mulf %47, %49 : vector<16x256xf32>
    %51 = tpu.concatenate %8, %14, %20, %26, %1, %32, %38, %44, %50 in 0 : vector<16x256xf32>, vector<16x256xf32>, vector<16x256xf32>, vector<16x256xf32>, vector<16x256xf32>, vector<16x256xf32>, vector<16x256xf32>, vector<16x256xf32>, vector<16x256xf32> -> vector<144x256xf32>
    %c0_4 = arith.constant 0 : index
    %c0_5 = arith.constant 0 : index
    %52 = vector.load %arg3[%c0_4, %c0_5] : memref<8x144xf32, #tpu.memory_space<vmem>>, vector<8x144xf32>
    %cst = arith.constant dense<0.000000e+00> : vector<8x256xf32>
    %53 = tpu.matmul %52, %51, %cst {dimension_numbers = #tpu.dot_dimension_numbers<[1], [0], [0], [1], [0, 0, 1, 1], [], []>} : vector<8x144xf32>, vector<144x256xf32>, vector<8x256xf32> -> vector<8x256xf32>
    %c0_6 = arith.constant 0 : index
    %c0_7 = arith.constant 0 : index
    %54 = vector.load %arg4[%c0_6, %c0_7] : memref<8x1xf32, #tpu.memory_space<vmem>>, vector<8x1xf32>
    %55 = vector.broadcast %54 : vector<8x1xf32> to vector<8x256xf32>
    %56 = arith.addf %53, %55 : vector<8x256xf32>
    %cst_8 = arith.constant 0.000000e+00 : f32
    %57 = vector.broadcast %cst_8 : f32 to vector<8x256xf32>
    %58 = arith.maximumf %56, %57 : vector<8x256xf32>
    %59 = vector.extract_strided_slice %58 {offsets = [0, 239], sizes = [8, 17], strides = [1, 1]} : vector<8x256xf32> to vector<8x17xf32>
    %60 = vector.extract_strided_slice %58 {offsets = [0, 0], sizes = [8, 239], strides = [1, 1]} : vector<8x256xf32> to vector<8x239xf32>
    %61 = tpu.concatenate %59, %60 in 1 : vector<8x17xf32>, vector<8x239xf32> -> vector<8x256xf32>
    %62 = vector.extract_strided_slice %2 {offsets = [0, 0], sizes = [1, 256], strides = [1, 1]} : vector<9x256xf32> to vector<1x256xf32>
    %63 = vector.broadcast %62 : vector<1x256xf32> to vector<8x256xf32>
    %64 = arith.mulf %61, %63 : vector<8x256xf32>
    %65 = vector.extract_strided_slice %58 {offsets = [0, 240], sizes = [8, 16], strides = [1, 1]} : vector<8x256xf32> to vector<8x16xf32>
    %66 = vector.extract_strided_slice %58 {offsets = [0, 0], sizes = [8, 240], strides = [1, 1]} : vector<8x256xf32> to vector<8x240xf32>
    %67 = tpu.concatenate %65, %66 in 1 : vector<8x16xf32>, vector<8x240xf32> -> vector<8x256xf32>
    %68 = vector.extract_strided_slice %2 {offsets = [1, 0], sizes = [1, 256], strides = [1, 1]} : vector<9x256xf32> to vector<1x256xf32>
    %69 = vector.broadcast %68 : vector<1x256xf32> to vector<8x256xf32>
    %70 = arith.mulf %67, %69 : vector<8x256xf32>
    %71 = vector.extract_strided_slice %58 {offsets = [0, 241], sizes = [8, 15], strides = [1, 1]} : vector<8x256xf32> to vector<8x15xf32>
    %72 = vector.extract_strided_slice %58 {offsets = [0, 0], sizes = [8, 241], strides = [1, 1]} : vector<8x256xf32> to vector<8x241xf32>
    %73 = tpu.concatenate %71, %72 in 1 : vector<8x15xf32>, vector<8x241xf32> -> vector<8x256xf32>
    %74 = vector.extract_strided_slice %2 {offsets = [2, 0], sizes = [1, 256], strides = [1, 1]} : vector<9x256xf32> to vector<1x256xf32>
    %75 = vector.broadcast %74 : vector<1x256xf32> to vector<8x256xf32>
    %76 = arith.mulf %73, %75 : vector<8x256xf32>
    %77 = vector.extract_strided_slice %58 {offsets = [0, 255], sizes = [8, 1], strides = [1, 1]} : vector<8x256xf32> to vector<8x1xf32>
    %78 = vector.extract_strided_slice %58 {offsets = [0, 0], sizes = [8, 255], strides = [1, 1]} : vector<8x256xf32> to vector<8x255xf32>
    %79 = tpu.concatenate %77, %78 in 1 : vector<8x1xf32>, vector<8x255xf32> -> vector<8x256xf32>
    %80 = vector.extract_strided_slice %2 {offsets = [3, 0], sizes = [1, 256], strides = [1, 1]} : vector<9x256xf32> to vector<1x256xf32>
    %81 = vector.broadcast %80 : vector<1x256xf32> to vector<8x256xf32>
    %82 = arith.mulf %79, %81 : vector<8x256xf32>
    %83 = vector.extract_strided_slice %58 {offsets = [0, 1], sizes = [8, 255], strides = [1, 1]} : vector<8x256xf32> to vector<8x255xf32>
    %84 = vector.extract_strided_slice %58 {offsets = [0, 0], sizes = [8, 1], strides = [1, 1]} : vector<8x256xf32> to vector<8x1xf32>
    %85 = tpu.concatenate %83, %84 in 1 : vector<8x255xf32>, vector<8x1xf32> -> vector<8x256xf32>
    %86 = vector.extract_strided_slice %2 {offsets = [5, 0], sizes = [1, 256], strides = [1, 1]} : vector<9x256xf32> to vector<1x256xf32>
    %87 = vector.broadcast %86 : vector<1x256xf32> to vector<8x256xf32>
    %88 = arith.mulf %85, %87 : vector<8x256xf32>
    %89 = vector.extract_strided_slice %58 {offsets = [0, 15], sizes = [8, 241], strides = [1, 1]} : vector<8x256xf32> to vector<8x241xf32>
    %90 = vector.extract_strided_slice %58 {offsets = [0, 0], sizes = [8, 15], strides = [1, 1]} : vector<8x256xf32> to vector<8x15xf32>
    %91 = tpu.concatenate %89, %90 in 1 : vector<8x241xf32>, vector<8x15xf32> -> vector<8x256xf32>
    %92 = vector.extract_strided_slice %2 {offsets = [6, 0], sizes = [1, 256], strides = [1, 1]} : vector<9x256xf32> to vector<1x256xf32>
    %93 = vector.broadcast %92 : vector<1x256xf32> to vector<8x256xf32>
    %94 = arith.mulf %91, %93 : vector<8x256xf32>
    %95 = vector.extract_strided_slice %58 {offsets = [0, 16], sizes = [8, 240], strides = [1, 1]} : vector<8x256xf32> to vector<8x240xf32>
    %96 = vector.extract_strided_slice %58 {offsets = [0, 0], sizes = [8, 16], strides = [1, 1]} : vector<8x256xf32> to vector<8x16xf32>
    %97 = tpu.concatenate %95, %96 in 1 : vector<8x240xf32>, vector<8x16xf32> -> vector<8x256xf32>
    %98 = vector.extract_strided_slice %2 {offsets = [7, 0], sizes = [1, 256], strides = [1, 1]} : vector<9x256xf32> to vector<1x256xf32>
    %99 = vector.broadcast %98 : vector<1x256xf32> to vector<8x256xf32>
    %100 = arith.mulf %97, %99 : vector<8x256xf32>
    %101 = vector.extract_strided_slice %58 {offsets = [0, 17], sizes = [8, 239], strides = [1, 1]} : vector<8x256xf32> to vector<8x239xf32>
    %102 = vector.extract_strided_slice %58 {offsets = [0, 0], sizes = [8, 17], strides = [1, 1]} : vector<8x256xf32> to vector<8x17xf32>
    %103 = tpu.concatenate %101, %102 in 1 : vector<8x239xf32>, vector<8x17xf32> -> vector<8x256xf32>
    %104 = vector.extract_strided_slice %2 {offsets = [8, 0], sizes = [1, 256], strides = [1, 1]} : vector<9x256xf32> to vector<1x256xf32>
    %105 = vector.broadcast %104 : vector<1x256xf32> to vector<8x256xf32>
    %106 = arith.mulf %103, %105 : vector<8x256xf32>
    %107 = tpu.concatenate %64, %70, %76, %82, %58, %88, %94, %100, %106 in 0 : vector<8x256xf32>, vector<8x256xf32>, vector<8x256xf32>, vector<8x256xf32>, vector<8x256xf32>, vector<8x256xf32>, vector<8x256xf32>, vector<8x256xf32>, vector<8x256xf32> -> vector<72x256xf32>
    %c0_9 = arith.constant 0 : index
    %c0_10 = arith.constant 0 : index
    %108 = vector.load %arg5[%c0_9, %c0_10] : memref<8x72xf32, #tpu.memory_space<vmem>>, vector<8x72xf32>
    %cst_11 = arith.constant dense<0.000000e+00> : vector<8x256xf32>
    %109 = tpu.matmul %108, %107, %cst_11 {dimension_numbers = #tpu.dot_dimension_numbers<[1], [0], [0], [1], [0, 0, 1, 1], [], []>} : vector<8x72xf32>, vector<72x256xf32>, vector<8x256xf32> -> vector<8x256xf32>
    %c0_12 = arith.constant 0 : index
    %c0_13 = arith.constant 0 : index
    %110 = vector.load %arg6[%c0_12, %c0_13] : memref<8x1xf32, #tpu.memory_space<vmem>>, vector<8x1xf32>
    %111 = vector.broadcast %110 : vector<8x1xf32> to vector<8x256xf32>
    %112 = arith.addf %109, %111 : vector<8x256xf32>
    %cst_14 = arith.constant 0.000000e+00 : f32
    %113 = vector.broadcast %cst_14 : f32 to vector<8x256xf32>
    %114 = arith.maximumf %112, %113 : vector<8x256xf32>
    %115 = vector.extract_strided_slice %114 {offsets = [0, 1], sizes = [8, 255], strides = [1, 1]} : vector<8x256xf32> to vector<8x255xf32>
    %116 = vector.extract_strided_slice %114 {offsets = [0, 0], sizes = [8, 1], strides = [1, 1]} : vector<8x256xf32> to vector<8x1xf32>
    %117 = tpu.concatenate %115, %116 in 1 : vector<8x255xf32>, vector<8x1xf32> -> vector<8x256xf32>
    %118 = vector.extract_strided_slice %2 {offsets = [5, 0], sizes = [1, 256], strides = [1, 1]} : vector<9x256xf32> to vector<1x256xf32>
    %119 = vector.broadcast %118 : vector<1x256xf32> to vector<8x256xf32>
    %120 = arith.mulf %117, %119 : vector<8x256xf32>
    %121 = vector.extract_strided_slice %114 {offsets = [0, 16], sizes = [8, 240], strides = [1, 1]} : vector<8x256xf32> to vector<8x240xf32>
    %122 = vector.extract_strided_slice %114 {offsets = [0, 0], sizes = [8, 16], strides = [1, 1]} : vector<8x256xf32> to vector<8x16xf32>
    %123 = tpu.concatenate %121, %122 in 1 : vector<8x240xf32>, vector<8x16xf32> -> vector<8x256xf32>
    %124 = vector.extract_strided_slice %2 {offsets = [7, 0], sizes = [1, 256], strides = [1, 1]} : vector<9x256xf32> to vector<1x256xf32>
    %125 = vector.broadcast %124 : vector<1x256xf32> to vector<8x256xf32>
    %126 = arith.mulf %123, %125 : vector<8x256xf32>
    %127 = vector.extract_strided_slice %114 {offsets = [0, 17], sizes = [8, 239], strides = [1, 1]} : vector<8x256xf32> to vector<8x239xf32>
    %128 = vector.extract_strided_slice %114 {offsets = [0, 0], sizes = [8, 17], strides = [1, 1]} : vector<8x256xf32> to vector<8x17xf32>
    %129 = tpu.concatenate %127, %128 in 1 : vector<8x239xf32>, vector<8x17xf32> -> vector<8x256xf32>
    %130 = vector.extract_strided_slice %2 {offsets = [8, 0], sizes = [1, 256], strides = [1, 1]} : vector<9x256xf32> to vector<1x256xf32>
    %131 = vector.broadcast %130 : vector<1x256xf32> to vector<8x256xf32>
    %132 = arith.mulf %129, %131 : vector<8x256xf32>
    %133 = tpu.concatenate %114, %120, %126, %132 in 0 : vector<8x256xf32>, vector<8x256xf32>, vector<8x256xf32>, vector<8x256xf32> -> vector<32x256xf32>
    %c0_15 = arith.constant 0 : index
    %c0_16 = arith.constant 0 : index
    %134 = vector.load %arg7[%c0_15, %c0_16] : memref<16x32xf32, #tpu.memory_space<vmem>>, vector<16x32xf32>
    %cst_17 = arith.constant dense<0.000000e+00> : vector<16x256xf32>
    %135 = tpu.matmul %134, %133, %cst_17 {dimension_numbers = #tpu.dot_dimension_numbers<[1], [0], [0], [1], [0, 0, 1, 1], [], []>} : vector<16x32xf32>, vector<32x256xf32>, vector<16x256xf32> -> vector<16x256xf32>
    %c0_18 = arith.constant 0 : index
    %c0_19 = arith.constant 0 : index
    %136 = vector.load %arg8[%c0_18, %c0_19] : memref<16x1xf32, #tpu.memory_space<vmem>>, vector<16x1xf32>
    %137 = vector.broadcast %136 : vector<16x1xf32> to vector<16x256xf32>
    %138 = arith.addf %135, %137 : vector<16x256xf32>
    %cst_20 = arith.constant 0.000000e+00 : f32
    %139 = vector.broadcast %cst_20 : f32 to vector<16x256xf32>
    %140 = arith.maximumf %138, %139 : vector<16x256xf32>
    %c0_21 = arith.constant 0 : index
    %c0_22 = arith.constant 0 : index
    %c0_23 = arith.constant 0 : index
    %141 = vector.load %arg9[%c0_21, %c0_22, %c0_23] : memref<1x16x256xf32, #tpu.memory_space<vmem>>, vector<1x16x256xf32>
    %142 = vector.shape_cast %141 : vector<1x16x256xf32> to vector<16x256xf32>
    %143 = vector.shape_cast %140 : vector<16x256xf32> to vector<1x16x256xf32>
    tpu.vector_store %arg9[%c0_21, %c0_22, %c0_23], %143 {strides = array<i32>} : memref<1x16x256xf32, #tpu.memory_space<vmem>>, vector<1x16x256xf32>,
    return
  }
  func.func @transform_0(%arg0: i32) -> (i32, i32, i32) {
    %c0_i32 = arith.constant 0 : i32
    %c0_i32_0 = arith.constant 0 : i32
    %c0_i32_1 = arith.constant 0 : i32
    return %arg0, %c0_i32, %c0_i32_0 : i32, i32, i32
  }
  func.func @transform_1(%arg0: i32) -> (i32, i32) {
    %c0_i32 = arith.constant 0 : i32
    %c0_i32_0 = arith.constant 0 : i32
    %c0_i32_1 = arith.constant 0 : i32
    return %c0_i32, %c0_i32_0 : i32, i32
  }
  func.func @transform_2(%arg0: i32) -> (i32, i32) {
    %c0_i32 = arith.constant 0 : i32
    %c0_i32_0 = arith.constant 0 : i32
    %c0_i32_1 = arith.constant 0 : i32
    return %c0_i32, %c0_i32_0 : i32, i32
  }
  func.func @transform_3(%arg0: i32) -> (i32, i32) {
    %c0_i32 = arith.constant 0 : i32
    %c0_i32_0 = arith.constant 0 : i32
    %c0_i32_1 = arith.constant 0 : i32
    return %c0_i32, %c0_i32_0 : i32, i32
  }
  func.func @transform_4(%arg0: i32) -> (i32, i32) {
    %c0_i32 = arith.constant 0 : i32
    %c0_i32_0 = arith.constant 0 : i32
    %c0_i32_1 = arith.constant 0 : i32
    return %c0_i32, %c0_i32_0 : i32, i32
  }
  func.func @transform_5(%arg0: i32) -> (i32, i32) {
    %c0_i32 = arith.constant 0 : i32
    %c0_i32_0 = arith.constant 0 : i32
    %c0_i32_1 = arith.constant 0 : i32
    return %c0_i32, %c0_i32_0 : i32, i32
  }
  func.func @transform_6(%arg0: i32) -> (i32, i32) {
    %c0_i32 = arith.constant 0 : i32
    %c0_i32_0 = arith.constant 0 : i32
    %c0_i32_1 = arith.constant 0 : i32
    return %c0_i32, %c0_i32_0 : i32, i32
  }
  func.func @transform_7(%arg0: i32) -> (i32, i32) {
    %c0_i32 = arith.constant 0 : i32
    %c0_i32_0 = arith.constant 0 : i32
    %c0_i32_1 = arith.constant 0 : i32
    return %c0_i32, %c0_i32_0 : i32, i32
  }
  func.func @transform_8(%arg0: i32) -> (i32, i32, i32) {
    %c0_i32 = arith.constant 0 : i32
    %c0_i32_0 = arith.constant 0 : i32
    %c0_i32_1 = arith.constant 0 : i32
    return %arg0, %c0_i32, %c0_i32_0 : i32, i32, i32
  }
}

</mosaic_0001>

<llo_original>
// kernel: upsample_forward.1
$region0: #{upsample_forward.1}
  #allocation0 [shape = 'u32[]', space=smem, size = 0x4, offset = 0x4, fixed_abs, tag = 'smem constant byte address 0x4 - core index']
  #allocation1 [shape = 'u32[144,128]{1,0:T(1,128)}', space=vmem, size = 0x12000, scoped, tag = 'internal scratch']
  %s0 = inlined_call_operand.vmem [shape: f32[2,16,256], index: 0, kind: input, shape index: {}]
  %s1 = inlined_call_operand.vmem [shape: f32[9,256], index: 1, kind: input, shape index: {}]
  %s2 = inlined_call_operand.vmem [shape: f32[8,144], index: 2, kind: input, shape index: {}]
  %s3 = inlined_call_operand.vmem [shape: f32[8,1], index: 3, kind: input, shape index: {}]
  %s4 = inlined_call_operand.vmem [shape: f32[8,72], index: 4, kind: input, shape index: {}]
  %s5 = inlined_call_operand.vmem [shape: f32[8,1], index: 5, kind: input, shape index: {}]
  %s6 = inlined_call_operand.vmem [shape: f32[16,32], index: 6, kind: input, shape index: {}]
  %s7 = inlined_call_operand.vmem [shape: f32[16,1], index: 7, kind: input, shape index: {}]
  %s8 = inlined_call_operand.vmem [shape: f32[2,16,256], index: 8, kind: output, shape index: {}]
  %s9 = sld [smem:[#allocation0]]
  $region65: #{upsample_forward.1} parent=0
    _
  %s11 = ssub.s32 1, %s9
  %s12 = scalar_select 0, %s11, %s9
  loop: start=0, step=1, limit=4
  $region2: #{upsample_forward.1} parent=0 // loop_pre_header
    _
  $region3: #{upsample_forward.1} parent=0 // loop_header
    %s14 = sphi 0, %s18
    %p15 = scmp.ge.s32.totalorder %s14, 4
    %s24 = sphi 0, %s26
    %s27 = sphi 0, %s24
    %s28 = sphi 0, %s27
    %s44 = sphi 0, %s28
    %s48 = sphi 0, %s48
    %s50 = sphi 0, %s48
    %s51 = sphi 0, %s50
    %s65 = sphi 0, %s51
    %s69 = sphi 0, %s69
    %s71 = sphi 0, %s69
    %s72 = sphi 0, %s71
    %s86 = sphi 0, %s72
    %s90 = sphi 0, %s90
    %s92 = sphi 0, %s90
    %s93 = sphi 0, %s92
    %s107 = sphi 0, %s93
    %s111 = sphi 0, %s111
    %s113 = sphi 0, %s111
    %s114 = sphi 0, %s113
    %s128 = sphi 0, %s114
    %s132 = sphi 0, %s132
    %s134 = sphi 0, %s132
    %s135 = sphi 0, %s134
    %s149 = sphi 0, %s135
    %s153 = sphi 0, %s153
    %s155 = sphi 0, %s153
    %s156 = sphi 0, %s155
    %s170 = sphi 0, %s156
    %s174 = sphi 0, %s174
    %s176 = sphi 0, %s174
    %s177 = sphi 0, %s176
    %s191 = sphi 0, %s177
    %s197 = sphi 0, %s199
    %s200 = sphi 0, %s197
    %s201 = sphi 0, %s200
    %s217 = sphi 0, %s201
  $region4: #{upsample_forward.1} parent=0 // loop_header_branch
    %17 = sbr.rel (%p15) target = $region8
  $region5: #{upsample_forward.1} parent=0 // loop_body
    %s19 = ssub.s32 %s14, 1
    %s20 = ssub.s32 %s14, 2
    %s21 = sadd.s32 %s14, 1
    %s22 = ssub.s32 %s14, %s21
    %p23 = scmp.eq.s32.totalorder %s22, 0
    %s25 = sadd.s32 %s24, 1
    %s26 = scalar_select %p23, %s24, %s25
    %p29 = pneg %p23
    %p30 = scmp.eq.s32.totalorder %s14, 1
    %p31 = por %p29, %p30
    %p32 = scmp.ne.s32.totalorder %s24, %s27
    %p33 = scmp.eq.s32.totalorder %s14, 0
    %p34 = por %p32, %p33
    %p35 = scmp.ne.s32.totalorder %s24, %s27
    %p36 = scmp.eq.s32.totalorder %s19, 1
    %p37 = por %p35, %p36
    %p38 = scmp.ne.s32.totalorder %s27, %s28
    %p39 = scmp.eq.s32.totalorder %s19, 0
    %p40 = por %p38, %p39
    %p41 = scmp.ne.s32.totalorder %s27, %s28
    %p42 = scmp.eq.s32.totalorder %s20, 1
    %p43 = por %p41, %p42
    %p45 = scmp.ne.s32.totalorder %s28, %s44
    %p46 = scmp.eq.s32.totalorder %s20, 0
    %p47 = por %p45, %p46
    %s49 = sadd.s32 %s48, 1
    %p52 = scmp.eq.s32.totalorder %s14, 1
    %p53 = scmp.ne.s32.totalorder %s48, %s50
    %p54 = scmp.eq.s32.totalorder %s14, 0
    %p55 = por %p53, %p54
    %p56 = scmp.ne.s32.totalorder %s48, %s50
    %p57 = scmp.eq.s32.totalorder %s19, 1
    %p58 = por %p56, %p57
    %p59 = scmp.ne.s32.totalorder %s50, %s51
    %p60 = scmp.eq.s32.totalorder %s19, 0
    %p61 = por %p59, %p60
    %p62 = scmp.ne.s32.totalorder %s50, %s51
    %p63 = scmp.eq.s32.totalorder %s20, 1
    %p64 = por %p62, %p63
    %p66 = scmp.ne.s32.totalorder %s51, %s65
    %p67 = scmp.eq.s32.totalorder %s20, 0
    %p68 = por %p66, %p67
    %s70 = sadd.s32 %s69, 1
    %p73 = scmp.eq.s32.totalorder %s14, 1
    %p74 = scmp.ne.s32.totalorder %s69, %s71
    %p75 = scmp.eq.s32.totalorder %s14, 0
    %p76 = por %p74, %p75
    %p77 = scmp.ne.s32.totalorder %s69, %s71
    %p78 = scmp.eq.s32.totalorder %s19, 1
    %p79 = por %p77, %p78
    %p80 = scmp.ne.s32.totalorder %s71, %s72
    %p81 = scmp.eq.s32.totalorder %s19, 0
    %p82 = por %p80, %p81
    %p83 = scmp.ne.s32.totalorder %s71, %s72
    %p84 = scmp.eq.s32.totalorder %s20, 1
    %p85 = por %p83, %p84
    %p87 = scmp.ne.s32.totalorder %s72, %s86
    %p88 = scmp.eq.s32.totalorder %s20, 0
    %p89 = por %p87, %p88
    %s91 = sadd.s32 %s90, 1
    %p94 = scmp.eq.s32.totalorder %s14, 1
    %p95 = scmp.ne.s32.totalorder %s90, %s92
    %p96 = scmp.eq.s32.totalorder %s14, 0
    %p97 = por %p95, %p96
    %p98 = scmp.ne.s32.totalorder %s90, %s92
    %p99 = scmp.eq.s32.totalorder %s19, 1
    %p100 = por %p98, %p99
    %p101 = scmp.ne.s32.totalorder %s92, %s93
    %p102 = scmp.eq.s32.totalorder %s19, 0
    %p103 = por %p101, %p102
    %p104 = scmp.ne.s32.totalorder %s92, %s93
    %p105 = scmp.eq.s32.totalorder %s20, 1
    %p106 = por %p104, %p105
    %p108 = scmp.ne.s32.totalorder %s93, %s107
    %p109 = scmp.eq.s32.totalorder %s20, 0
    %p110 = por %p108, %p109
    %s112 = sadd.s32 %s111, 1
    %p115 = scmp.eq.s32.totalorder %s14, 1
    %p116 = scmp.ne.s32.totalorder %s111, %s113
    %p117 = scmp.eq.s32.totalorder %s14, 0
    %p118 = por %p116, %p117
    %p119 = scmp.ne.s32.totalorder %s111, %s113
    %p120 = scmp.eq.s32.totalorder %s19, 1
    %p121 = por %p119, %p120
    %p122 = scmp.ne.s32.totalorder %s113, %s114
    %p123 = scmp.eq.s32.totalorder %s19, 0
    %p124 = por %p122, %p123
    %p125 = scmp.ne.s32.totalorder %s113, %s114
    %p126 = scmp.eq.s32.totalorder %s20, 1
    %p127 = por %p125, %p126
    %p129 = scmp.ne.s32.totalorder %s114, %s128
    %p130 = scmp.eq.s32.totalorder %s20, 0
    %p131 = por %p129, %p130
    %s133 = sadd.s32 %s132, 1
    %p136 = scmp.eq.s32.totalorder %s14, 1
    %p137 = scmp.ne.s32.totalorder %s132, %s134
    %p138 = scmp.eq.s32.totalorder %s14, 0
    %p139 = por %p137, %p138
    %p140 = scmp.ne.s32.totalorder %s132, %s134
    %p141 = scmp.eq.s32.totalorder %s19, 1
    %p142 = por %p140, %p141
    %p143 = scmp.ne.s32.totalorder %s134, %s135
    %p144 = scmp.eq.s32.totalorder %s19, 0
    %p145 = por %p143, %p144
    %p146 = scmp.ne.s32.totalorder %s134, %s135
    %p147 = scmp.eq.s32.totalorder %s20, 1
    %p148 = por %p146, %p147
    %p150 = scmp.ne.s32.totalorder %s135, %s149
    %p151 = scmp.eq.s32.totalorder %s20, 0
    %p152 = por %p150, %p151
    %s154 = sadd.s32 %s153, 1
    %p157 = scmp.eq.s32.totalorder %s14, 1
    %p158 = scmp.ne.s32.totalorder %s153, %s155
    %p159 = scmp.eq.s32.totalorder %s14, 0
    %p160 = por %p158, %p159
    %p161 = scmp.ne.s32.totalorder %s153, %s155
    %p162 = scmp.eq.s32.totalorder %s19, 1
    %p163 = por %p161, %p162
    %p164 = scmp.ne.s32.totalorder %s155, %s156
    %p165 = scmp.eq.s32.totalorder %s19, 0
    %p166 = por %p164, %p165
    %p167 = scmp.ne.s32.totalorder %s155, %s156
    %p168 = scmp.eq.s32.totalorder %s20, 1
    %p169 = por %p167, %p168
    %p171 = scmp.ne.s32.totalorder %s156, %s170
    %p172 = scmp.eq.s32.totalorder %s20, 0
    %p173 = por %p171, %p172
    %s175 = sadd.s32 %s174, 1
    %p178 = scmp.eq.s32.totalorder %s14, 1
    %p179 = scmp.ne.s32.totalorder %s174, %s176
    %p180 = scmp.eq.s32.totalorder %s14, 0
    %p181 = por %p179, %p180
    %p182 = scmp.ne.s32.totalorder %s174, %s176
    %p183 = scmp.eq.s32.totalorder %s19, 1
    %p184 = por %p182, %p183
    %p185 = scmp.ne.s32.totalorder %s176, %s177
    %p186 = scmp.eq.s32.totalorder %s19, 0
    %p187 = por %p185, %p186
    %p188 = scmp.ne.s32.totalorder %s176, %s177
    %p189 = scmp.eq.s32.totalorder %s20, 1
    %p190 = por %p188, %p189
    %p192 = scmp.ne.s32.totalorder %s177, %s191
    %p193 = scmp.eq.s32.totalorder %s20, 0
    %p194 = por %p192, %p193
    %s195 = ssub.s32 %s14, %s21
    %p196 = scmp.eq.s32.totalorder %s195, 0
    %s198 = sadd.s32 %s197, 1
    %s199 = scalar_select %p196, %s197, %s198
    %p202 = pneg %p196
    %p203 = scmp.eq.s32.totalorder %s14, 1
    %p204 = por %p202, %p203
    %p205 = scmp.ne.s32.totalorder %s197, %s200
    %p206 = scmp.eq.s32.totalorder %s14, 0
    %p207 = por %p205, %p206
    %p208 = scmp.ne.s32.totalorder %s197, %s200
    %p209 = scmp.eq.s32.totalorder %s19, 1
    %p210 = por %p208, %p209
    %p211 = scmp.ne.s32.totalorder %s200, %s201
    %p212 = scmp.eq.s32.totalorder %s19, 0
    %p213 = por %p211, %p212
    %p214 = scmp.ne.s32.totalorder %s200, %s201
    %p215 = scmp.eq.s32.totalorder %s20, 1
    %p216 = por %p214, %p215
    %p218 = scmp.ne.s32.totalorder %s201, %s217
    %p219 = scmp.eq.s32.totalorder %s20, 0
    %p220 = por %p218, %p219
    %p221 = scmp.le.s32.totalorder 1, %s14
    %p222 = scmp.lt.s32.totalorder %s14, 3
    %p223 = pnand %p221, %p222
    %p224 = pneg %p223
    // Predicated region
    $region9: #{upsample_forward.1} parent=5 // pred_check
      _
    $region10: #{upsample_forward.1} parent=5 // pred_check_branch
      %226 = sbr.rel (%p223) target = $region12
    $region11: #{upsample_forward.1} parent=5 // pred_region
      %s227 = ssub.s32 %s14, 1
      // Predicated region
      $region13: #{upsample_forward.1} parent=11 // pred_check
        %p228 = pneg %p61
      $region14: #{upsample_forward.1} parent=11 // pred_check_branch
        %230 = sbr.rel (%p228) target = $region16
      $region15: #{upsample_forward.1} parent=11 // pred_region
        _
      $region16: #{upsample_forward.1} parent=11 // pred_fallthru
        _
      // Predicated region
      $region17: #{upsample_forward.1} parent=11 // pred_check
        %p231 = pneg %p82
      $region18: #{upsample_forward.1} parent=11 // pred_check_branch
        %233 = sbr.rel (%p231) target = $region20
      $region19: #{upsample_forward.1} parent=11 // pred_region
        _
      $region20: #{upsample_forward.1} parent=11 // pred_fallthru
        _
      // Predicated region
      $region21: #{upsample_forward.1} parent=11 // pred_check
        %p234 = pneg %p103
      $region22: #{upsample_forward.1} parent=11 // pred_check_branch
        %236 = sbr.rel (%p234) target = $region24
      $region23: #{upsample_forward.1} parent=11 // pred_region
        _
      $region24: #{upsample_forward.1} parent=11 // pred_fallthru
        _
      // Predicated region
      $region25: #{upsample_forward.1} parent=11 // pred_check
        %p237 = pneg %p124
      $region26: #{upsample_forward.1} parent=11 // pred_check_branch
        %239 = sbr.rel (%p237) target = $region28
      $region27: #{upsample_forward.1} parent=11 // pred_region
        _
      $region28: #{upsample_forward.1} parent=11 // pred_fallthru
        _
      // Predicated region
      $region29: #{upsample_forward.1} parent=11 // pred_check
        %p240 = pneg %p145
      $region30: #{upsample_forward.1} parent=11 // pred_check_branch
        %242 = sbr.rel (%p240) target = $region32
      $region31: #{upsample_forward.1} parent=11 // pred_region
        _
      $region32: #{upsample_forward.1} parent=11 // pred_fallthru
        _
      // Predicated region
      $region33: #{upsample_forward.1} parent=11 // pred_check
        %p243 = pneg %p166
      $region34: #{upsample_forward.1} parent=11 // pred_check_branch
        %245 = sbr.rel (%p243) target = $region36
      $region35: #{upsample_forward.1} parent=11 // pred_region
        _
      $region36: #{upsample_forward.1} parent=11 // pred_fallthru
        _
      // Predicated region
      $region37: #{upsample_forward.1} parent=11 // pred_check
        %p246 = pneg %p187
      $region38: #{upsample_forward.1} parent=11 // pred_check_branch
        %248 = sbr.rel (%p246) target = $region40
      $region39: #{upsample_forward.1} parent=11 // pred_region
        _
      $region40: #{upsample_forward.1} parent=11 // pred_fallthru
        _
    $region12: #{upsample_forward.1} parent=5 // pred_fallthru
      _
    %p249 = scmp.lt.s32.totalorder %s14, 2
    // Predicated region
    $region41: #{upsample_forward.1} parent=5 // pred_check
      %p250 = pneg %p249
    $region42: #{upsample_forward.1} parent=5 // pred_check_branch
      %252 = sbr.rel (%p250) target = $region44
    $region43: #{upsample_forward.1} parent=5 // pred_region
      // Predicated region
      $region45: #{upsample_forward.1} parent=43 // pred_check
        %p253 = pneg %p34
      $region46: #{upsample_forward.1} parent=43 // pred_check_branch
        %255 = sbr.rel (%p253) target = $region48
      $region47: #{upsample_forward.1} parent=43 // pred_region
        %p256 = scmp.lt.s32.totalorder %s14, 1
        %s257 = scalar_select %p256, %s14, 1
        %s258 = smul.addr %s257, 4
        %s259 = smul.addr %s258, 8
        %s260 = scalar_lea.vmem %s0, %s259
      $region48: #{upsample_forward.1} parent=43 // pred_fallthru
        _
    $region44: #{upsample_forward.1} parent=5 // pred_fallthru
      _
    %p261 = scmp.le.s32.totalorder 1, %s14
    %p262 = scmp.lt.s32.totalorder %s14, 3
    %p263 = pnand %p261, %p262
    %p264 = pneg %p263
    // Predicated region
    $region49: #{upsample_forward.1} parent=5 // pred_check
      _
    $region50: #{upsample_forward.1} parent=5 // pred_check_branch
      %266 = sbr.rel (%p263) target = $region52
    $region51: #{upsample_forward.1} parent=5 // pred_region
      %s267 = ssub.s32 %s14, 1
      %p268 = scmp.lt.s32.totalorder %s19, 1
      %s269 = scalar_select %p268, %s19, 1
      %s270 = smul.addr %s269, 4
      %s271 = smul.addr %s270, 8
      %s272 = scalar_lea.vmem %s0, %s271
      %p273 = pneg %p40
      %p274 = pneg %p37
      %p275 = pneg %p61
      %p276 = pneg %p58
      %p277 = pneg %p82
      %p278 = pneg %p79
      %p279 = pneg %p103
      %p280 = pneg %p100
      %p281 = pneg %p124
      %p282 = pneg %p121
      %p283 = pneg %p145
      %p284 = pneg %p142
      %p285 = pneg %p166
      %p286 = pneg %p163
      %p287 = pneg %p187
      %p288 = pneg %p184
      %p289 = pneg %p213
      %p290 = pneg %p210
      %p291 = scmp.lt.s32.totalorder %s19, 1
      %s292 = scalar_select %p291, %s19, 1
      %s293 = smul.addr %s292, 4
      %s294 = smul.addr %s293, 8
      %s295 = scalar_lea.vmem %s8, %s294
      %p296 = scmp.lt.s32.totalorder %s19, 1
      %s297 = scalar_select %p296, %s19, 1
      %s298 = smul.addr %s297, 4
      %s299 = smul.addr %s298, 8
      %s300 = scalar_lea.vmem %s0, %s299
      %p301 = scmp.lt.s32.totalorder %s19, 1
      %s302 = scalar_select %p301, %s19, 1
      %s303 = smul.addr %s302, 4
      %s304 = smul.addr %s303, 8
      %s305 = scalar_lea.vmem %s8, %s304
      %v306 = vld [vmem:[%s300] sm:$0xff]
      %v307 = vld [vmem:[%s300 + $0x8] sm:$0xff]
      %v308 = vld [vmem:[%s300 + $0x10] sm:$0xff]
      %v309 = vld [vmem:[%s300 + $0x18] sm:$0xff]
      %v310 = vld [vmem:[%s1] sm:$0xff]
      %v311 = vld [vmem:[%s1 + $0x8] sm:$0xff]
      %v312 = vld [vmem:[%s1 + $0x10] sm:$0x1]
      %v313 = vld [vmem:[%s1 + $0x18] sm:$0x1]
      %316 = vrot.lane.b32.xlu0 %v307, 17
      %v317 = vpop.permute.xlu0 %316
      %318 = vrot.lane.b32.xlu0 %v309, 17
      %v319 = vpop.permute.xlu0 %318
      %324 = vrot.lane.b32.xlu0 %v306, 17
      %v325 = vpop.permute.xlu0 %324
      %326 = vrot.lane.b32.xlu0 %v308, 17
      %v327 = vpop.permute.xlu0 %326
      %vm328 = vcmask 138240
      %v329 = vsel %vm328, %v325, %v317
      %v330 = vsel %vm328, %v327, %v319
      %v335 = vsel %vm328, %v317, %v325
      %v336 = vsel %vm328, %v319, %v327
      %v337 = vlaneseq
      %v338 = vshrl.u32 %v337, 7
      %v339 = vsub.s32 0, %v338
      %v340 = vrot.slane %v310, %v339
      %v341 = vlaneseq
      %v342 = vshrl.u32 %v341, 7
      %v343 = vsub.s32 0, %v342
      %v344 = vrot.slane %v311, %v343
      %v345 = vmul.f32 %v335, %v340
      %v346 = vmul.f32 %v329, %v344
      %v347 = vmul.f32 %v336, %v340
      %v348 = vmul.f32 %v330, %v344
      %349 = vrot.lane.b32.xlu0 %v307, 16
      %v350 = vpop.permute.xlu0 %349
      %351 = vrot.lane.b32.xlu0 %v309, 16
      %v352 = vpop.permute.xlu0 %351
      %355 = vrot.lane.b32.xlu0 %v306, 16
      %v356 = vpop.permute.xlu0 %355
      %357 = vrot.lane.b32.xlu0 %v308, 16
      %v358 = vpop.permute.xlu0 %357
      %vm359 = vcmask 130048
      %v360 = vsel %vm359, %v356, %v350
      %v361 = vsel %vm359, %v358, %v352
      %v366 = vsel %vm359, %v350, %v356
      %v367 = vsel %vm359, %v352, %v358
      %v368 = vlaneseq
      %v369 = vshrl.u32 %v368, 7
      %v370 = vsub.s32 1, %v369
      %v371 = vrot.slane %v310, %v370
      %v372 = vlaneseq
      %v373 = vshrl.u32 %v372, 7
      %v374 = vsub.s32 1, %v373
      %v375 = vrot.slane %v311, %v374
      %v376 = vmul.f32 %v366, %v371
      %v377 = vmul.f32 %v360, %v375
      %v378 = vmul.f32 %v367, %v371
      %v379 = vmul.f32 %v361, %v375
      %380 = vrot.lane.b32.xlu0 %v307, 15
      %v381 = vpop.permute.xlu0 %380
      %382 = vrot.lane.b32.xlu0 %v309, 15
      %v383 = vpop.permute.xlu0 %382
      %386 = vrot.lane.b32.xlu0 %v306, 15
      %v387 = vpop.permute.xlu0 %386
      %388 = vrot.lane.b32.xlu0 %v308, 15
      %v389 = vpop.permute.xlu0 %388
      %vm390 = vcmask 121856
      %v391 = vsel %vm390, %v387, %v381
      %v392 = vsel %vm390, %v389, %v383
      %v397 = vsel %vm390, %v381, %v387
      %v398 = vsel %vm390, %v383, %v389
      %v399 = vlaneseq
      %v400 = vshrl.u32 %v399, 7
      %v401 = vsub.s32 2, %v400
      %v402 = vrot.slane %v310, %v401
      %v403 = vlaneseq
      %v404 = vshrl.u32 %v403, 7
      %v405 = vsub.s32 2, %v404
      %v406 = vrot.slane %v311, %v405
      %v407 = vmul.f32 %v397, %v402
      %v408 = vmul.f32 %v391, %v406
      %v409 = vmul.f32 %v398, %v402
      %v410 = vmul.f32 %v392, %v406
      %411 = vrot.lane.b32.xlu0 %v307, 1
      %v412 = vpop.permute.xlu0 %411
      %413 = vrot.lane.b32.xlu0 %v309, 1
      %v414 = vpop.permute.xlu0 %413
      %417 = vrot.lane.b32.xlu0 %v306, 1
      %v418 = vpop.permute.xlu0 %417
      %419 = vrot.lane.b32.xlu0 %v308, 1
      %v420 = vpop.permute.xlu0 %419
      %vm421 = vcmask 7168
      %v422 = vsel %vm421, %v418, %v412
      %v423 = vsel %vm421, %v420, %v414
      %v428 = vsel %vm421, %v412, %v418
      %v429 = vsel %vm421, %v414, %v420
      %v430 = vlaneseq
      %v431 = vshrl.u32 %v430, 7
      %v432 = vsub.s32 3, %v431
      %v433 = vrot.slane %v310, %v432
      %v434 = vlaneseq
      %v435 = vshrl.u32 %v434, 7
      %v436 = vsub.s32 3, %v435
      %v437 = vrot.slane %v311, %v436
      %v438 = vmul.f32 %v428, %v433
      %v439 = vmul.f32 %v422, %v437
      %v440 = vmul.f32 %v429, %v433
      %v441 = vmul.f32 %v423, %v437
      %442 = vrot.lane.b32.xlu0 %v306, 127
      %v443 = vpop.permute.xlu0 %442
      %444 = vrot.lane.b32.xlu0 %v307, 127
      %v445 = vpop.permute.xlu0 %444
      %446 = vrot.lane.b32.xlu0 %v308, 127
      %v447 = vpop.permute.xlu0 %446
      %448 = vrot.lane.b32.xlu0 %v309, 127
      %v449 = vpop.permute.xlu0 %448
      %vm450 = vcmask 1039360
      %v451 = vsel %vm450, %v443, %v445
      %v452 = vsel %vm450, %v447, %v449
      %v459 = vsel %vm450, %v445, %v443
      %v460 = vsel %vm450, %v449, %v447
      %v461 = vlaneseq
      %v462 = vshrl.u32 %v461, 7
      %v463 = vsub.s32 5, %v462
      %v464 = vrot.slane %v310, %v463
      %v465 = vlaneseq
      %v466 = vshrl.u32 %v465, 7
      %v467 = vsub.s32 5, %v466
      %v468 = vrot.slane %v311, %v467
      %v469 = vmul.f32 %v451, %v464
      %v470 = vmul.f32 %v459, %v468
      %v471 = vmul.f32 %v452, %v464
      %v472 = vmul.f32 %v460, %v468
      %473 = vrot.lane.b32.xlu0 %v306, 113
      %v474 = vpop.permute.xlu0 %473
      %475 = vrot.lane.b32.xlu0 %v307, 113
      %v476 = vpop.permute.xlu0 %475
      %477 = vrot.lane.b32.xlu0 %v308, 113
      %v478 = vpop.permute.xlu0 %477
      %479 = vrot.lane.b32.xlu0 %v309, 113
      %v480 = vpop.permute.xlu0 %479
      %vm481 = vcmask 924672
      %v482 = vsel %vm481, %v474, %v476
      %v483 = vsel %vm481, %v478, %v480
      %v490 = vsel %vm481, %v476, %v474
      %v491 = vsel %vm481, %v480, %v478
      %v492 = vlaneseq
      %v493 = vshrl.u32 %v492, 7
      %v494 = vsub.s32 6, %v493
      %v495 = vrot.slane %v310, %v494
      %v496 = vlaneseq
      %v497 = vshrl.u32 %v496, 7
      %v498 = vsub.s32 6, %v497
      %v499 = vrot.slane %v311, %v498
      %v500 = vmul.f32 %v482, %v495
      %v501 = vmul.f32 %v490, %v499
      %v502 = vmul.f32 %v483, %v495
      %v503 = vmul.f32 %v491, %v499
      %504 = vrot.lane.b32.xlu0 %v306, 112
      %v505 = vpop.permute.xlu0 %504
      %506 = vrot.lane.b32.xlu0 %v307, 112
      %v507 = vpop.permute.xlu0 %506
      %508 = vrot.lane.b32.xlu0 %v308, 112
      %v509 = vpop.permute.xlu0 %508
      %510 = vrot.lane.b32.xlu0 %v309, 112
      %v511 = vpop.permute.xlu0 %510
      %vm512 = vcmask 916480
      %v513 = vsel %vm512, %v505, %v507
      %v514 = vsel %vm512, %v509, %v511
      %v521 = vsel %vm512, %v507, %v505
      %v522 = vsel %vm512, %v511, %v509
      %v523 = vlaneseq
      %v524 = vshrl.u32 %v523, 7
      %v525 = vsub.s32 7, %v524
      %v526 = vrot.slane %v310, %v525
      %v527 = vlaneseq
      %v528 = vshrl.u32 %v527, 7
      %v529 = vsub.s32 7, %v528
      %v530 = vrot.slane %v311, %v529
      %v531 = vmul.f32 %v513, %v526
      %v532 = vmul.f32 %v521, %v530
      %v533 = vmul.f32 %v514, %v526
      %v534 = vmul.f32 %v522, %v530
      %535 = vrot.lane.b32.xlu0 %v306, 111
      %v536 = vpop.permute.xlu0 %535
      %537 = vrot.lane.b32.xlu0 %v307, 111
      %v538 = vpop.permute.xlu0 %537
      %539 = vrot.lane.b32.xlu0 %v308, 111
      %v540 = vpop.permute.xlu0 %539
      %541 = vrot.lane.b32.xlu0 %v309, 111
      %v542 = vpop.permute.xlu0 %541
      %vm543 = vcmask 908288
      %v544 = vsel %vm543, %v536, %v538
      %v545 = vsel %vm543, %v540, %v542
      %v552 = vsel %vm543, %v538, %v536
      %v553 = vsel %vm543, %v542, %v540
      %v554 = vlaneseq
      %v555 = vshrl.u32 %v554, 7
      %v556 = vsub.s32 0, %v555
      %v557 = vrot.slane %v312, %v556
      %v558 = vlaneseq
      %v559 = vshrl.u32 %v558, 7
      %v560 = vsub.s32 0, %v559
      %v561 = vrot.slane %v313, %v560
      %v562 = vmul.f32 %v544, %v557
      %v563 = vmul.f32 %v552, %v561
      %v564 = vmul.f32 %v545, %v557
      %v565 = vmul.f32 %v553, %v561
      %v566 = vld [vmem:[%s2] sm:$0xff]
      %v567 = vld [vmem:[%s2 + $0x8] sm:$0xff]
      %v568 = vld [vmem:[%s3] sm:$0xff]
      %570 = vset.pattern.permute.xlu0 0
      %571 = vperm.xlu0 %570, %v568
      %v572 = vpop.permute.xlu0 %571
      %v575 = vsel %vm359, %v567, 0
      %577 = vmatprep.subr.mxu0 %v534
      %578 = vmatpush1.msra.mxu0 %v533
      %579 = vmatprep.subr.mxu0 %v532
      %580 = vmatpush1.msra.mxu0 %v531
      %581 = vmatprep.subr.mxu0 %v503
      %582 = vmatpush1.msra.mxu0 %v502
      %583 = vmatprep.subr.mxu0 %v501
      %584 = vmatpush1.msra.mxu0 %v500
      %585 = vmatprep.subr.mxu0 %v472
      %586 = vmatpush1.msra.mxu0 %v471
      %587 = vmatprep.subr.mxu0 %v470
      %588 = vmatpush1.msra.mxu0 %v469
      %589 = vmatprep.subr.mxu0 %v309
      %590 = vmatpush1.msra.mxu0 %v308
      %591 = vmatprep.subr.mxu0 %v307
      %592 = vmatpush1.msra.mxu0 %v306
      %593 = vmatprep.subr.mxu0 %v441
      %594 = vmatpush1.msra.mxu0 %v440
      %595 = vmatprep.subr.mxu0 %v439
      %596 = vmatpush1.msra.mxu0 %v438
      %597 = vmatprep.subr.mxu0 %v410
      %598 = vmatpush1.msra.mxu0 %v409
      %599 = vmatprep.subr.mxu0 %v408
      %600 = vmatpush1.msra.mxu0 %v407
      %601 = vmatprep.subr.mxu0 %v379
      %602 = vmatpush1.msra.mxu0 %v378
      %603 = vmatprep.subr.mxu0 %v377
      %604 = vmatpush1.msra.mxu0 %v376
      %605 = vmatprep.subr.mxu0 %v348
      %606 = vmatpush1.msra.mxu0 %v347
      %607 = vmatprep.subr.mxu0 %v346
      %608 = vmatpush1.msra.mxu0 %v345
      %609 = vmatprep.subr.mxu0 0.0
      %610 = vmatpush2.msra.mxu0 0.0
      %611 = vmatprep.subr.mxu0 0.0
      %612 = vmatpush2.msra.mxu0 0.0
      %613 = vmatprep.subr.mxu0 0.0
      %614 = vmatpush2.msra.mxu0 0.0
      %615 = vmatprep.subr.mxu0 0.0
      %616 = vmatpush2.msra.mxu0 0.0
      %617 = vmatprep.subr.mxu0 0.0
      %618 = vmatpush2.msra.mxu0 0.0
      %619 = vmatprep.subr.mxu0 0.0
      %620 = vmatpush2.msra.mxu0 0.0
      %621 = vmatprep.subr.mxu0 0.0
      %622 = vmatpush2.msra.mxu0 0.0
      %623 = vmatprep.subr.mxu0 0.0
      %624 = vmatpush2.msra.mxu0 0.0
      %625 = vmatprep.subr.mxu0 0.0
      %626 = vmatpush2.msra.mxu0 0.0
      %627 = vmatprep.subr.mxu0 0.0
      %628 = vmatpush2.msra.mxu0 0.0
      %629 = vmatprep.subr.mxu0 0.0
      %630 = vmatpush2.msra.mxu0 0.0
      %631 = vmatprep.subr.mxu0 0.0
      %632 = vmatpush2.msra.mxu0 0.0
      %633 = vmatprep.subr.mxu0 0.0
      %634 = vmatpush2.msra.mxu0 0.0
      %635 = vmatprep.subr.mxu0 0.0
      %636 = vmatpush2.msra.mxu0 0.0
      %637 = vmatprep.subr.mxu0 %v565
      %638 = vmatpush2.msra.mxu0 %v564
      %639 = vmatprep.subr.mxu0 %v563
      %640 = vmatpush2.msra.mxu0 %v562
      %641 = vmatprep.mubr.f32.mxu0 %v575
      %642 = vmatmul.mubr.f32.gmra.mxu0 %v566
      %v643 = vpop.f32.mrf.mxu0
      %v644 = vadd.f32 %v572, %v643
      %v645 = vpop.f32.mrf.mxu0
      %v646 = vadd.f32 %v572, %v645
      %647 = vdwg.mxu0
      %v648 = vmax.f32 %v644, 0.0
      %v649 = vmax.f32 %v646, 0.0
      %651 = vrot.lane.b32.xlu0 %v649, 17
      %v652 = vpop.permute.xlu0 %651
      %655 = vrot.lane.b32.xlu0 %v648, 17
      %v656 = vpop.permute.xlu0 %655
      %v657 = vsel %vm328, %v656, %v652
      %v660 = vsel %vm328, %v652, %v656
      %v661 = vmul.f32 %v660, %v340
      %v662 = vmul.f32 %v657, %v344
      %663 = vrot.lane.b32.xlu0 %v649, 16
      %v664 = vpop.permute.xlu0 %663
      %666 = vrot.lane.b32.xlu0 %v648, 16
      %v667 = vpop.permute.xlu0 %666
      %v668 = vsel %vm359, %v667, %v664
      %v671 = vsel %vm359, %v664, %v667
      %v672 = vmul.f32 %v671, %v371
      %v673 = vmul.f32 %v668, %v375
      %674 = vrot.lane.b32.xlu0 %v649, 15
      %v675 = vpop.permute.xlu0 %674
      %677 = vrot.lane.b32.xlu0 %v648, 15
      %v678 = vpop.permute.xlu0 %677
      %v679 = vsel %vm390, %v678, %v675
      %v682 = vsel %vm390, %v675, %v678
      %v683 = vmul.f32 %v682, %v402
      %v684 = vmul.f32 %v679, %v406
      %685 = vrot.lane.b32.xlu0 %v649, 1
      %v686 = vpop.permute.xlu0 %685
      %688 = vrot.lane.b32.xlu0 %v648, 1
      %v689 = vpop.permute.xlu0 %688
      %v690 = vsel %vm421, %v689, %v686
      %v693 = vsel %vm421, %v686, %v689
      %v694 = vmul.f32 %v693, %v433
      %v695 = vmul.f32 %v690, %v437
      %696 = vrot.lane.b32.xlu0 %v648, 127
      %v697 = vpop.permute.xlu0 %696
      %698 = vrot.lane.b32.xlu0 %v649, 127
      %v699 = vpop.permute.xlu0 %698
      %v700 = vsel %vm450, %v697, %v699
      %v704 = vsel %vm450, %v699, %v697
      %v705 = vmul.f32 %v700, %v464
      %v706 = vmul.f32 %v704, %v468
      %707 = vrot.lane.b32.xlu0 %v648, 113
      %v708 = vpop.permute.xlu0 %707
      %709 = vrot.lane.b32.xlu0 %v649, 113
      %v710 = vpop.permute.xlu0 %709
      %v711 = vsel %vm481, %v708, %v710
      %v715 = vsel %vm481, %v710, %v708
      %v716 = vmul.f32 %v711, %v495
      %v717 = vmul.f32 %v715, %v499
      %718 = vrot.lane.b32.xlu0 %v648, 112
      %v719 = vpop.permute.xlu0 %718
      %720 = vrot.lane.b32.xlu0 %v649, 112
      %v721 = vpop.permute.xlu0 %720
      %v722 = vsel %vm512, %v719, %v721
      %v726 = vsel %vm512, %v721, %v719
      %v727 = vmul.f32 %v722, %v526
      %v728 = vmul.f32 %v726, %v530
      %729 = vrot.lane.b32.xlu0 %v648, 111
      %v730 = vpop.permute.xlu0 %729
      %731 = vrot.lane.b32.xlu0 %v649, 111
      %v732 = vpop.permute.xlu0 %731
      %v733 = vsel %vm543, %v730, %v732
      %v737 = vsel %vm543, %v732, %v730
      %v738 = vmul.f32 %v733, %v557
      %v739 = vmul.f32 %v737, %v561
      %v740 = vld [vmem:[%s4] sm:$0xff]
      %v741 = vld [vmem:[%s5] sm:$0xff]
      %743 = vset.pattern.permute.xlu0 0
      %744 = vperm.xlu0 %743, %v741
      %v745 = vpop.permute.xlu0 %744
      %vm747 = vcmask 588800
      %v749 = vsel %vm747, %v740, 0
      %751 = vmatprep.subr.mxu0 0.0
      %752 = vmatpush1.msra.mxu0 0.0
      %753 = vmatprep.subr.mxu0 0.0
      %754 = vmatpush1.msra.mxu0 0.0
      %755 = vmatprep.subr.mxu0 0.0
      %756 = vmatpush1.msra.mxu0 0.0
      %757 = vmatprep.subr.mxu0 0.0
      %758 = vmatpush1.msra.mxu0 0.0
      %759 = vmatprep.subr.mxu0 0.0
      %760 = vmatpush1.msra.mxu0 0.0
      %761 = vmatprep.subr.mxu0 0.0
      %762 = vmatpush1.msra.mxu0 0.0
      %763 = vmatprep.subr.mxu0 0.0
      %764 = vmatpush1.msra.mxu0 0.0
      %765 = vmatprep.subr.mxu0 %v739
      %766 = vmatpush1.msra.mxu0 %v738
      %767 = vmatprep.subr.mxu0 %v728
      %768 = vmatpush1.msra.mxu0 %v727
      %769 = vmatprep.subr.mxu0 %v717
      %770 = vmatpush1.msra.mxu0 %v716
      %771 = vmatprep.subr.mxu0 %v706
      %772 = vmatpush1.msra.mxu0 %v705
      %773 = vmatprep.subr.mxu0 %v649
      %774 = vmatpush1.msra.mxu0 %v648
      %775 = vmatprep.subr.mxu0 %v695
      %776 = vmatpush1.msra.mxu0 %v694
      %777 = vmatprep.subr.mxu0 %v684
      %778 = vmatpush1.msra.mxu0 %v683
      %779 = vmatprep.subr.mxu0 %v673
      %780 = vmatpush1.msra.mxu0 %v672
      %781 = vmatprep.subr.mxu0 %v662
      %782 = vmatpush1.msra.mxu0 %v661
      %783 = vmatprep.subr.mxu0 0.0
      %784 = vmatpush2.msra.mxu0 0.0
      %785 = vmatprep.subr.mxu0 0.0
      %786 = vmatpush2.msra.mxu0 0.0
      %787 = vmatprep.subr.mxu0 0.0
      %788 = vmatpush2.msra.mxu0 0.0
      %789 = vmatprep.subr.mxu0 0.0
      %790 = vmatpush2.msra.mxu0 0.0
      %791 = vmatprep.subr.mxu0 0.0
      %792 = vmatpush2.msra.mxu0 0.0
      %793 = vmatprep.subr.mxu0 0.0
      %794 = vmatpush2.msra.mxu0 0.0
      %795 = vmatprep.subr.mxu0 0.0
      %796 = vmatpush2.msra.mxu0 0.0
      %797 = vmatprep.subr.mxu0 0.0
      %798 = vmatpush2.msra.mxu0 0.0
      %799 = vmatprep.subr.mxu0 0.0
      %800 = vmatpush2.msra.mxu0 0.0
      %801 = vmatprep.subr.mxu0 0.0
      %802 = vmatpush2.msra.mxu0 0.0
      %803 = vmatprep.subr.mxu0 0.0
      %804 = vmatpush2.msra.mxu0 0.0
      %805 = vmatprep.subr.mxu0 0.0
      %806 = vmatpush2.msra.mxu0 0.0
      %807 = vmatprep.subr.mxu0 0.0
      %808 = vmatpush2.msra.mxu0 0.0
      %809 = vmatprep.subr.mxu0 0.0
      %810 = vmatpush2.msra.mxu0 0.0
      %811 = vmatprep.subr.mxu0 0.0
      %812 = vmatpush2.msra.mxu0 0.0
      %813 = vmatprep.subr.mxu0 0.0
      %814 = vmatpush2.msra.mxu0 0.0
      %815 = vmatprep.mubr.f32.mxu0 0.0
      %816 = vmatmul.mubr.f32.gmra.mxu0 %v749
      %v817 = vpop.f32.mrf.mxu0
      %v818 = vadd.f32 %v745, %v817
      %v819 = vpop.f32.mrf.mxu0
      %v820 = vadd.f32 %v745, %v819
      %821 = vdwg.mxu0
      %v822 = vmax.f32 %v818, 0.0
      %v823 = vmax.f32 %v820, 0.0
      %826 = vrot.lane.b32.xlu0 %v822, 127
      %v827 = vpop.permute.xlu0 %826
      %828 = vrot.lane.b32.xlu0 %v823, 127
      %v829 = vpop.permute.xlu0 %828
      %v830 = vsel %vm450, %v827, %v829
      %v834 = vsel %vm450, %v829, %v827
      %v835 = vmul.f32 %v830, %v464
      %v836 = vmul.f32 %v834, %v468
      %837 = vrot.lane.b32.xlu0 %v822, 112
      %v838 = vpop.permute.xlu0 %837
      %839 = vrot.lane.b32.xlu0 %v823, 112
      %v840 = vpop.permute.xlu0 %839
      %v841 = vsel %vm512, %v838, %v840
      %v845 = vsel %vm512, %v840, %v838
      %v846 = vmul.f32 %v841, %v526
      %v847 = vmul.f32 %v845, %v530
      %848 = vrot.lane.b32.xlu0 %v822, 111
      %v849 = vpop.permute.xlu0 %848
      %850 = vrot.lane.b32.xlu0 %v823, 111
      %v851 = vpop.permute.xlu0 %850
      %v852 = vsel %vm543, %v849, %v851
      %v856 = vsel %vm543, %v851, %v849
      %v857 = vmul.f32 %v852, %v557
      %v858 = vmul.f32 %v856, %v561
      %v859 = vld [vmem:[%s6] sm:$0xff]
      %v860 = vld [vmem:[%s6 + $0x8] sm:$0xff]
      %v861 = vld [vmem:[%s7] sm:$0xff]
      %v862 = vld [vmem:[%s7 + $0x8] sm:$0xff]
      %864 = vset.pattern.permute.xlu0 0
      %865 = vperm.xlu0 %864, %v861
      %v866 = vpop.permute.xlu0 %865
      %869 = vset.pattern.permute.xlu0 0
      %870 = vperm.xlu0 %869, %v862
      %v871 = vpop.permute.xlu0 %870
      %vm873 = vcmask 261120
      %v875 = vsel %vm873, %v859, 0
      %v878 = vsel %vm873, %v860, 0
      %880 = vmatprep.subr.mxu0 0.0
      %881 = vmatpush1.msra.mxu0 0.0
      %882 = vmatprep.subr.mxu0 0.0
      %883 = vmatpush1.msra.mxu0 0.0
      %884 = vmatprep.subr.mxu0 0.0
      %885 = vmatpush1.msra.mxu0 0.0
      %886 = vmatprep.subr.mxu0 0.0
      %887 = vmatpush1.msra.mxu0 0.0
      %888 = vmatprep.subr.mxu0 0.0
      %889 = vmatpush1.msra.mxu0 0.0
      %890 = vmatprep.subr.mxu0 0.0
      %891 = vmatpush1.msra.mxu0 0.0
      %892 = vmatprep.subr.mxu0 0.0
      %893 = vmatpush1.msra.mxu0 0.0
      %894 = vmatprep.subr.mxu0 0.0
      %895 = vmatpush1.msra.mxu0 0.0
      %896 = vmatprep.subr.mxu0 0.0
      %897 = vmatpush1.msra.mxu0 0.0
      %898 = vmatprep.subr.mxu0 0.0
      %899 = vmatpush1.msra.mxu0 0.0
      %900 = vmatprep.subr.mxu0 0.0
      %901 = vmatpush1.msra.mxu0 0.0
      %902 = vmatprep.subr.mxu0 0.0
      %903 = vmatpush1.msra.mxu0 0.0
      %904 = vmatprep.subr.mxu0 %v858
      %905 = vmatpush1.msra.mxu0 %v857
      %906 = vmatprep.subr.mxu0 %v847
      %907 = vmatpush1.msra.mxu0 %v846
      %908 = vmatprep.subr.mxu0 %v836
      %909 = vmatpush1.msra.mxu0 %v835
      %910 = vmatprep.subr.mxu0 %v823
      %911 = vmatpush1.msra.mxu0 %v822
      %912 = vmatprep.subr.mxu0 0.0
      %913 = vmatpush2.msra.mxu0 0.0
      %914 = vmatprep.subr.mxu0 0.0
      %915 = vmatpush2.msra.mxu0 0.0
      %916 = vmatprep.subr.mxu0 0.0
      %917 = vmatpush2.msra.mxu0 0.0
      %918 = vmatprep.subr.mxu0 0.0
      %919 = vmatpush2.msra.mxu0 0.0
      %920 = vmatprep.subr.mxu0 0.0
      %921 = vmatpush2.msra.mxu0 0.0
      %922 = vmatprep.subr.mxu0 0.0
      %923 = vmatpush2.msra.mxu0 0.0
      %924 = vmatprep.subr.mxu0 0.0
      %925 = vmatpush2.msra.mxu0 0.0
      %926 = vmatprep.subr.mxu0 0.0
      %927 = vmatpush2.msra.mxu0 0.0
      %928 = vmatprep.subr.mxu0 0.0
      %929 = vmatpush2.msra.mxu0 0.0
      %930 = vmatprep.subr.mxu0 0.0
      %931 = vmatpush2.msra.mxu0 0.0
      %932 = vmatprep.subr.mxu0 0.0
      %933 = vmatpush2.msra.mxu0 0.0
      %934 = vmatprep.subr.mxu0 0.0
      %935 = vmatpush2.msra.mxu0 0.0
      %936 = vmatprep.subr.mxu0 0.0
      %937 = vmatpush2.msra.mxu0 0.0
      %938 = vmatprep.subr.mxu0 0.0
      %939 = vmatpush2.msra.mxu0 0.0
      %940 = vmatprep.subr.mxu0 0.0
      %941 = vmatpush2.msra.mxu0 0.0
      %942 = vmatprep.subr.mxu0 0.0
      %943 = vmatpush2.msra.mxu0 0.0
      %944 = vmatprep.mubr.f32.mxu0 0.0
      %945 = vmatmul.mubr.f32.gmra.mxu0 %v875
      %v946 = vpop.f32.mrf.mxu0
      %v947 = vadd.f32 %v866, %v946
      %v948 = vpop.f32.mrf.mxu0
      %v949 = vadd.f32 %v866, %v948
      %950 = vmatprep.mubr.f32.mxu0 0.0
      %951 = vmatmul.mubr.f32.gmra.mxu0 %v878
      %v952 = vpop.f32.mrf.mxu0
      %v953 = vadd.f32 %v871, %v952
      %v954 = vpop.f32.mrf.mxu0
      %v955 = vadd.f32 %v871, %v954
      %956 = vdwg.mxu0
      %v957 = vmax.f32 %v947, 0.0
      %v958 = vmax.f32 %v949, 0.0
      %v959 = vmax.f32 %v953, 0.0
      %v960 = vmax.f32 %v955, 0.0
      %961 = vst [vmem:[%s305] sm:$0xff] %v957
      %962 = vst [vmem:[%s305 + $0x8] sm:$0xff] %v958
      %963 = vst [vmem:[%s305 + $0x10] sm:$0xff] %v959
      %964 = vst [vmem:[%s305 + $0x18] sm:$0xff] %v960
      %p965 = scmp.lt.s32.totalorder %s19, 1
      %s966 = scalar_select %p965, %s19, 1
      %s967 = smul.addr %s966, 4
      %s968 = smul.addr %s967, 8
      %s969 = scalar_lea.vmem %s8, %s968
      // Predicated region
      $region53: #{upsample_forward.1} parent=51 // pred_check
        %p970 = pneg %p210
      $region54: #{upsample_forward.1} parent=51 // pred_check_branch
        %972 = sbr.rel (%p970) target = $region56
      $region55: #{upsample_forward.1} parent=51 // pred_region
        _
      $region56: #{upsample_forward.1} parent=51 // pred_fallthru
        _
    $region52: #{upsample_forward.1} parent=5 // pred_fallthru
      _
    %p973 = scmp.le.s32.totalorder 2, %s14
    // Predicated region
    $region57: #{upsample_forward.1} parent=5 // pred_check
      %p974 = pneg %p973
    $region58: #{upsample_forward.1} parent=5 // pred_check_branch
      %976 = sbr.rel (%p974) target = $region60
    $region59: #{upsample_forward.1} parent=5 // pred_region
      %s977 = ssub.s32 %s14, 2
      // Predicated region
      $region61: #{upsample_forward.1} parent=59 // pred_check
        %p978 = pneg %p216
      $region62: #{upsample_forward.1} parent=59 // pred_check_branch
        %980 = sbr.rel (%p978) target = $region64
      $region63: #{upsample_forward.1} parent=59 // pred_region
        %p981 = scmp.lt.s32.totalorder %s20, 1
        %s982 = scalar_select %p981, %s20, 1
        %s983 = smul.addr %s982, 4
        %s984 = smul.addr %s983, 8
        %s985 = scalar_lea.vmem %s8, %s984
      $region64: #{upsample_forward.1} parent=59 // pred_fallthru
        _
    $region60: #{upsample_forward.1} parent=5 // pred_fallthru
      _
  $region6: #{upsample_forward.1} parent=0 // loop_footer
    %s18 = sadd.s32 1, %s14
  $region7: #{upsample_forward.1} parent=0 // loop_footer_branch
    %13 = sbr.rel target = $region3
  $region8: #{upsample_forward.1} parent=0 // loop_exit
    _

</llo_original>
